<compile_context>
chip_gen: v7x
topology: tpu7x:2x2x1
jax: 0.10.0
libtpu: 0.0.40
codegen_flags: <defaults>
</compile_context>

<pallas_src>
import functools

import jax
import jax.numpy as jnp
from jax.experimental import pallas as pl
from jax.experimental.pallas import tpu as pltpu

_LANE = 128
_SUBLANE = 8


def _round_up(v, m):
    return (v + m - 1) // m * m


def _layernorm_kernel(x_ref, alpha_ref, bias_ref, o_ref, *, eps, d_valid):
    """Row-wise LayerNorm over the last dim (torch semantics: ddof=1, eps on std)."""
    x = x_ref[...].astype(jnp.float32)            # (TILE_R, D_pad)
    d_pad = x.shape[-1]
    padded = d_pad != d_valid

    if padded:
        # Zero the lane padding so it does not pollute the row statistics.
        lane = jax.lax.broadcasted_iota(jnp.int32, x.shape, dimension=1)
        valid = lane < d_valid
        x = jnp.where(valid, x, 0.0)

    mean = jnp.sum(x, axis=-1, keepdims=True) * jnp.float32(1.0 / d_valid)
    centered = x - mean
    if padded:
        centered = jnp.where(valid, centered, 0.0)

    # torch.Tensor.std defaults to the unbiased estimator (ddof = 1).
    # Assumes d_valid >= 2 (torch returns NaN for d == 1).
    var = jnp.sum(centered * centered, axis=-1, keepdims=True) * jnp.float32(
        1.0 / (d_valid - 1))
    std = jnp.sqrt(var)

    # Scalars read once from SMEM; alpha folded into the per-row scale so the
    # epilogue is one full-width multiply + add (reciprocal uses the EUP slot).
    alpha = alpha_ref[0]
    bias = bias_ref[0]
    scale = alpha * pl.reciprocal(std + jnp.float32(eps), approx=False)  # (TILE_R, 1)
    o_ref[...] = (centered * scale + bias).astype(o_ref.dtype)


def encoder_forward(x, mask, alpha, bias, *, eps=1e-6, tile_rows=None):
    """Encoder.forward: (empty layer stack) -> LayerNormalization(x).

    Args:
      x:    (..., D) activations, e.g. (B, S, D).
      mask: attention mask (unused with an empty layer stack, kept for parity).
      alpha, bias: scalar LayerNormalization parameters, shape (1,).
    """
    del mask  # consumed only by the (empty) external layer stack
    orig_shape = x.shape
    d = orig_shape[-1]
    n_rows = 1
    for s in orig_shape[:-1]:
        n_rows *= s
    x2 = x.reshape(n_rows, d)

    # Lane-dense last dim: pad D up to a multiple of 128 only when needed.
    d_pad = _round_up(d, _LANE)
    if d_pad != d:
        x2 = jnp.pad(x2, ((0, 0), (0, d_pad - d)))

    # Row tile: large enough to amortize per-step pipeline overhead, small
    # enough that double-buffered in+out blocks (+ f32 temporaries) fit the
    # smallest VMEM budget (v7x 64 MiB physical / v5e 16 MiB default scoped).
    if tile_rows is None:
        budget_bytes = 4 * 1024 * 1024                      # per input block (f32)
        tile_rows = max(_SUBLANE, budget_bytes // (d_pad * 4))
        tile_rows = min(tile_rows, 1024)
    tile_rows = min(int(tile_rows), n_rows)
    if tile_rows != n_rows:
        tile_rows = max(_SUBLANE, (tile_rows // _SUBLANE) * _SUBLANE)

    grid = (pl.cdiv(n_rows, tile_rows),)

    # Explicit scoped-VMEM request: 2x double-buffered in + out blocks plus the
    # f32 upcast temporaries, floored at the 32 MiB default, capped for v7x.
    block_bytes = tile_rows * d_pad * x2.dtype.itemsize
    f32_tmp_bytes = 3 * tile_rows * d_pad * 4
    vmem_limit = int(min(max(4 * block_bytes + f32_tmp_bytes + (1 << 20),
                             32 * 1024 * 1024),
                         64 * 1024 * 1024))

    kernel = functools.partial(_layernorm_kernel, eps=eps, d_valid=d)
    out = pl.pallas_call(
        kernel,
        out_shape=jax.ShapeDtypeStruct((n_rows, d_pad), x.dtype),
        grid=grid,
        in_specs=[
            pl.BlockSpec((tile_rows, d_pad), lambda i: (i, 0)),
            pl.BlockSpec(memory_space=pltpu.MemorySpace.SMEM),
            pl.BlockSpec(memory_space=pltpu.MemorySpace.SMEM),
        ],
        out_specs=pl.BlockSpec((tile_rows, d_pad), lambda i: (i, 0)),
        compiler_params=pltpu.CompilerParams(
            dimension_semantics=("parallel",),
            vmem_limit_bytes=vmem_limit,
        ),
    )(x2, alpha, bias)

    if d_pad != d:
        out = out[:, :d]
    return out.reshape(orig_shape)


def _reference(x, alpha, bias, eps=1e-6):
    mean = jnp.mean(x, axis=-1, keepdims=True)
    std = jnp.std(x, axis=-1, keepdims=True, ddof=1)
    return alpha[0] * (x - mean) / (std + eps) + bias[0]


if __name__ == "__main__":
    key = jax.random.PRNGKey(0)
    B, S, D = 2, 8, 32
    kx, km = jax.random.split(key)
    x = jax.random.normal(kx, (B, S, D), dtype=jnp.float32)
    # Causal-ish boolean mask (unused by the empty layer stack, shape for parity).
    mask = (jax.random.uniform(km, (B, 1, S, S)) > 0.1)

    # Deterministic parameter init, matching LayerNormalization.__init__.
    alpha = jnp.ones((1,), dtype=jnp.float32)
    bias = jnp.zeros((1,), dtype=jnp.float32)

    out = encoder_forward(x, mask, alpha, bias)
    out = jax.block_until_ready(out)

    ref = _reference(x, alpha, bias)
    assert out.shape == (B, S, D)
    assert jnp.allclose(out, ref, atol=1e-5, rtol=1e-5), "mismatch vs reference"
    print("KERNEL_OK")
</pallas_src>

<mosaic_0001>
module attributes {stable_mosaic.version = 11 : i64} {
  func.func @_layernorm_kernel(%arg0: i32, %arg1: memref<16x128xf32, #tpu.memory_space<vmem>>, %arg2: memref<1xf32, #tpu.memory_space<smem>>, %arg3: memref<1xf32, #tpu.memory_space<smem>>, %arg4: memref<16x128xf32, #tpu.memory_space<vmem>>) attributes {dimension_semantics = [#tpu.dimension_semantics<parallel>], iteration_bounds = array<i64: 1>, scalar_prefetch = 0 : i64, scratch_operands = 0 : i64, tpu.core_type = #tpu.core_type<tc>, window_params = [{transform_indices = @transform_0, window_bounds = array<i64: 16, 128>}, {transform_indices = @transform_1, window_bounds = array<i64: 1>}, {transform_indices = @transform_2, window_bounds = array<i64: 1>}, {transform_indices = @transform_3, window_bounds = array<i64: 16, 128>}]} {
    %c0 = arith.constant 0 : index
    %c0_0 = arith.constant 0 : index
    %0 = vector.load %arg1[%c0, %c0_0] : memref<16x128xf32, #tpu.memory_space<vmem>>, vector<16x128xf32>
    %1 = tpu.iota {dimensions = array<i32: 1>} : vector<16x128xi32>
    %c32_i32 = arith.constant 32 : i32
    %2 = vector.broadcast %c32_i32 : i32 to vector<16x128xi32>
    %3 = arith.cmpi slt, %1, %2 : vector<16x128xi32>
    %cst = arith.constant 0.000000e+00 : f32
    %4 = vector.broadcast %cst : f32 to vector<16x128xf32>
    %5 = arith.select %3, %0, %4 : vector<16x128xi1>, vector<16x128xf32>
    %cst_1 = arith.constant dense<0.000000e+00> : vector<16xf32>
    %6 = vector.multi_reduction <add>, %5, %cst_1 [1] : vector<16x128xf32> to vector<16xf32>
    %7 = vector.shape_cast %6 : vector<16xf32> to vector<16x1xf32>
    %cst_2 = arith.constant 3.125000e-02 : f32
    %8 = vector.broadcast %cst_2 : f32 to vector<16x1xf32>
    %9 = arith.mulf %7, %8 : vector<16x1xf32>
    %10 = vector.broadcast %9 : vector<16x1xf32> to vector<16x128xf32>
    %11 = arith.subf %5, %10 : vector<16x128xf32>
    %cst_3 = arith.constant 0.000000e+00 : f32
    %12 = vector.broadcast %cst_3 : f32 to vector<16x128xf32>
    %13 = arith.select %3, %11, %12 : vector<16x128xi1>, vector<16x128xf32>
    %14 = arith.mulf %13, %13 : vector<16x128xf32>
    %cst_4 = arith.constant dense<0.000000e+00> : vector<16xf32>
    %15 = vector.multi_reduction <add>, %14, %cst_4 [1] : vector<16x128xf32> to vector<16xf32>
    %16 = vector.shape_cast %15 : vector<16xf32> to vector<16x1xf32>
    %cst_5 = arith.constant 0.0322580636 : f32
    %17 = vector.broadcast %cst_5 : f32 to vector<16x1xf32>
    %18 = arith.mulf %16, %17 : vector<16x1xf32>
    %19 = math.sqrt %18 : vector<16x1xf32>
    %c0_6 = arith.constant 0 : index
    %20 = memref.load %arg2[%c0_6] : memref<1xf32, #tpu.memory_space<smem>>
    %c0_7 = arith.constant 0 : index
    %21 = memref.load %arg3[%c0_7] : memref<1xf32, #tpu.memory_space<smem>>
    %cst_8 = arith.constant 9.99999997E-7 : f32
    %22 = vector.broadcast %cst_8 : f32 to vector<16x1xf32>
    %23 = arith.addf %19, %22 : vector<16x1xf32>
    %24 = tpu.reciprocal %23 : vector<16x1xf32> -> vector<16x1xf32>
    %25 = vector.broadcast %20 : f32 to vector<16x1xf32>
    %26 = arith.mulf %25, %24 : vector<16x1xf32>
    %27 = vector.broadcast %26 : vector<16x1xf32> to vector<16x128xf32>
    %28 = arith.mulf %13, %27 : vector<16x128xf32>
    %29 = vector.broadcast %21 : f32 to vector<16x128xf32>
    %30 = arith.addf %28, %29 : vector<16x128xf32>
    %c0_9 = arith.constant 0 : index
    %c0_10 = arith.constant 0 : index
    %31 = vector.load %arg4[%c0_9, %c0_10] : memref<16x128xf32, #tpu.memory_space<vmem>>, vector<16x128xf32>
    tpu.vector_store %arg4[%c0_9, %c0_10], %30 {strides = array<i32>} : memref<16x128xf32, #tpu.memory_space<vmem>>, vector<16x128xf32>,
    return
  }
  func.func @transform_0(%arg0: i32) -> (i32, i32) {
    %c0_i32 = arith.constant 0 : i32
    %c0_i32_0 = arith.constant 0 : i32
    return %arg0, %c0_i32 : i32, i32
  }
  func.func @transform_1(%arg0: i32) -> i32 {
    %c0_i32 = arith.constant 0 : i32
    %c0_i32_0 = arith.constant 0 : i32
    return %c0_i32 : i32
  }
  func.func @transform_2(%arg0: i32) -> i32 {
    %c0_i32 = arith.constant 0 : i32
    %c0_i32_0 = arith.constant 0 : i32
    return %c0_i32 : i32
  }
  func.func @transform_3(%arg0: i32) -> (i32, i32) {
    %c0_i32 = arith.constant 0 : i32
    %c0_i32_0 = arith.constant 0 : i32
    return %arg0, %c0_i32 : i32, i32
  }
}

</mosaic_0001>

<llo_original>
// kernel: tpu_custom_call.1
$region0: #{tpu_custom_call.1}
  #allocation0 [shape = 'u32[]', space=smem, size = 0x4, offset = 0x4, fixed_abs, tag = 'smem constant byte address 0x4 - core index']
  #allocation1 [shape = 'u32[144,128]{1,0:T(1,128)}', space=vmem, size = 0x12000, scoped, tag = 'internal scratch']
  #allocation2 [shape = 'f32[1]{0:T(128)S(6)}', space=smem, size = 0x200, scoped, tag = 'scoped memory for tpu_custom_call.1']
  #allocation3 [shape = 'f32[1]{0:T(128)S(6)}', space=smem, size = 0x200, scoped, tag = 'scoped memory for tpu_custom_call.1']
  %s0 = inlined_call_operand.hbm [shape: f32[16,128], index: 0, kind: input, shape index: {}]
  %s1 = inlined_call_operand.<no memory space> [shape: f32[1], index: 1, kind: input, shape index: {}]
  %s2 = inlined_call_operand.<no memory space> [shape: f32[1], index: 2, kind: input, shape index: {}]
  %s3 = inlined_call_operand.hbm [shape: f32[16,128], index: 3, kind: output, shape index: {}]
  %s4 = sld [smem:[#allocation0]]
  $region26: #{tpu_custom_call.1} parent=0
    _
  %s6 = ssub.s32 1, %s4
  %s7 = scalar_select 0, %s6, %s4
  %8 = sst [smem:[#allocation2]] %s1
  %9 = sst [smem:[#allocation3]] %s2
  $region1: #{tpu_custom_call.1} parent=0
    #allocation4 [shape = 'u8[8192]{0}', space=vmem, size = 0x2000, scoped, tag = 'input window, operand 0, single buffered']
    #allocation5 [shape = 's32[1]{0}', space=sflag, size = 0x4, scoped, tag = 'scoped memory for tpu_custom_call.1']
    #allocation6 [shape = 's32[1]{0}', space=sflag, size = 0x4, scoped, tag = 'scoped memory for tpu_custom_call.1']
    #allocation7 [shape = 'u8[8192]{0}', space=vmem, size = 0x2000, scoped, tag = 'output window, operand 0, single buffered']
    %10 = vsyncpa [#allocation5], 0
    %11 = vsyncpa [#allocation6], 0
    // Predicated region
    $region2: #{tpu_custom_call.1} parent=1 // pred_check
      _
    $region3: #{tpu_custom_call.1} parent=1 // pred_check_branch
      %13 = sbr.rel (0) target = $region5
    $region4: #{tpu_custom_call.1} parent=1 // pred_region
      %s15 = ssub.s32 256, 256
      %16 = vsyncadd [#allocation5], %s15
      %s17 = sshll.u32 [#allocation4], 4
      %s18 = int_to_ptr.vmem [resolvable:$true] %s17
      %23 = dma.hbm_to_vmem [thread:$0]  %s0, 256, %s18, [#allocation5], 128, 128, 8
    $region5: #{tpu_custom_call.1} parent=1 // pred_fallthru
      _
    // Predicated region
    $region6: #{tpu_custom_call.1} parent=1 // pred_check
      _
    $region7: #{tpu_custom_call.1} parent=1 // pred_check_branch
      %25 = sbr.rel (0) target = $region9
    $region8: #{tpu_custom_call.1} parent=1 // pred_region
      _
    $region9: #{tpu_custom_call.1} parent=1 // pred_fallthru
      _
    // Predicated region
    $region10: #{tpu_custom_call.1} parent=1 // pred_check
      _
    $region11: #{tpu_custom_call.1} parent=1 // pred_check_branch
      %27 = sbr.rel (0) target = $region13
    $region12: #{tpu_custom_call.1} parent=1 // pred_region
      _
    $region13: #{tpu_custom_call.1} parent=1 // pred_fallthru
      _
    // Predicated region
    $region14: #{tpu_custom_call.1} parent=1 // pred_check
      _
    $region15: #{tpu_custom_call.1} parent=1 // pred_check_branch
      %29 = sbr.rel (0) target = $region17
    $region16: #{tpu_custom_call.1} parent=1 // pred_region
      %30 = dma.done [#allocation5], 256
    $region17: #{tpu_custom_call.1} parent=1 // pred_fallthru
      _
    %v31 = vld [vmem:[#allocation4] sm:$0xff]
    %v32 = vld [vmem:[#allocation4 + $0x8] sm:$0xff]
    %v33 = vlaneseq
    %v34 = vand.u32 %v33, 127
    %vm35 = vcmp.lt.s32.totalorder %v34, 32
    %v36 = vsel %vm35, %v31, 0.0
    %v37 = vsel %vm35, %v32, 0.0
    %38 = vadd.xlane.f32.xlu0 %v36
    %v39 = vpop.xlane.xlu0 %38
    %40 = vadd.xlane.f32.xlu0 %v37
    %v41 = vpop.xlane.xlu0 %40
    %v42 = vmul.f32 %v39, 0.03125
    %v43 = vmul.f32 %v41, 0.03125
    %v44 = vsub.f32 %v36, %v42
    %v45 = vsub.f32 %v37, %v43
    %v46 = vsel %vm35, %v44, 0.0
    %v47 = vsel %vm35, %v45, 0.0
    %v48 = vmul.f32 %v46, %v46
    %v49 = vmul.f32 %v47, %v47
    %50 = vadd.xlane.f32.xlu0 %v48
    %v51 = vpop.xlane.xlu0 %50
    %52 = vadd.xlane.f32.xlu0 %v49
    %v53 = vpop.xlane.xlu0 %52
    %v54 = vmul.f32 %v51, 0.032258064
    %v55 = vmul.f32 %v53, 0.032258064
    %v56 = vrsqrt.pop %v54
    %v57 = vmul.f32 %v54, %v56
    %vm58 = vcmp.eq.f32.partialorder %v54, inf
    %v59 = vsel %vm58, %v54, %v57
    %vm60 = vcmp.eq.f32.partialorder %v54, 0.0
    %v61 = vand.u32 %v54, 2147483648
    %v62 = vsel %vm60, %v61, %v59
    %v63 = vrsqrt.pop %v55
    %v64 = vmul.f32 %v55, %v63
    %vm65 = vcmp.eq.f32.partialorder %v55, inf
    %v66 = vsel %vm65, %v55, %v64
    %vm67 = vcmp.eq.f32.partialorder %v55, 0.0
    %v68 = vand.u32 %v55, 2147483648
    %v69 = vsel %vm67, %v68, %v66
    %s70 = sld [smem:[#allocation2]]
    %s71 = sld [smem:[#allocation3]]
    %v72 = vadd.f32 %v62, 1e-06
    %v73 = vadd.f32 %v69, 1e-06
    %v74 = vrcp.pop %v72
    %v75 = vrcp.pop %v73
    %v76 = vstv %s70
    %v77 = vmul.f32 %v76, %v74
    %v78 = vmul.f32 %v76, %v75
    %v79 = vmul.f32 %v46, %v77
    %v80 = vmul.f32 %v47, %v78
    %v81 = vstv %s71
    %v82 = vadd.f32 %v79, %v81
    %v83 = vadd.f32 %v80, %v81
    %84 = vst [vmem:[#allocation7] sm:$0xff] %v82
    %85 = vst [vmem:[#allocation7 + $0x8] sm:$0xff] %v83
    // Predicated region
    $region18: #{tpu_custom_call.1} parent=1 // pred_check
      _
    $region19: #{tpu_custom_call.1} parent=1 // pred_check_branch
      %87 = sbr.rel (0) target = $region21
    $region20: #{tpu_custom_call.1} parent=1 // pred_region
      %s89 = ssub.s32 256, 256
      %90 = vsyncadd [#allocation6], %s89
      %s91 = sshll.u32 [#allocation7], 4
      %s92 = int_to_ptr.vmem [resolvable:$true] %s91
      %97 = dma.vmem_to_hbm [thread:$0]  %s92, 256, %s3, [#allocation6], 128, 128, 8
    $region21: #{tpu_custom_call.1} parent=1 // pred_fallthru
      _
    // Predicated region
    $region22: #{tpu_custom_call.1} parent=1 // pred_check
      _
    $region23: #{tpu_custom_call.1} parent=1 // pred_check_branch
      %99 = sbr.rel (0) target = $region25
    $region24: #{tpu_custom_call.1} parent=1 // pred_region
      %100 = dma.done [#allocation6], 256
    $region25: #{tpu_custom_call.1} parent=1 // pred_fallthru
      _
    %101 = vsyncpa [#allocation5], 1
    %102 = vsyncpa [#allocation6], 1

</llo_original>
